<compile_context>
chip_gen: v7x
topology: tpu7x:2x2x1
jax: 0.10.0
libtpu: 0.0.40
codegen_flags: <defaults>
</compile_context>

<pallas_src>
import functools
import operator

import jax
import jax.numpy as jnp
from jax import lax
from jax.experimental import pallas as pl
from jax.experimental.pallas import tpu as pltpu


def _tree_sum(xs):
    """Pairwise tree reduction (log-depth instead of a serial add chain)."""
    xs = list(xs)
    while len(xs) > 1:
        nxt = [xs[i] + xs[i + 1] for i in range(0, len(xs) - 1, 2)]
        if len(xs) % 2:
            nxt.append(xs[-1])
        xs = nxt
    return xs[0]


def bigram_kernel(idx_ref, tgt_ref, table_ref, logits_ref, loss_ref):
    # idx_ref / tgt_ref : (N,) int32 in SMEM (scalar-prefetched)
    # table_ref         : (V, V) f32 VMEM block (whole table resident)
    # logits_ref        : (N, V) f32 VMEM output block
    # loss_ref          : (1, 1) f32 SMEM output
    N, V = logits_ref.shape

    # --- Embedding lookup: dynamic-sublane row copies, table -> logits.
    # N is a small static constant (B*T = 16); each copy is a VMEM vld/vst.
    for n in range(N):
        row = idx_ref[n]
        logits_ref[pl.ds(n, 1), :] = table_ref[pl.ds(row, 1), :]

    logits = logits_ref[...]

    # --- Build the (N, 1) target column from SMEM scalars (tree-structured:
    # each select is independent, then a log-depth sum).
    row_ids = lax.broadcasted_iota(jnp.int32, (N, 1), 0)
    tgt_cols = [
        jnp.where(row_ids == n, tgt_ref[n], jnp.int32(0)) for n in range(N)
    ]
    tgt_col = _tree_sum(tgt_cols)

    # --- Cross entropy: mean_n [ logsumexp(logits[n]) - logits[n, tgt[n]] ]
    # Valid because the block covers the full (N, V) array (no padded rows).
    m = jnp.max(logits, axis=-1, keepdims=True)
    lse = m + jnp.log(jnp.sum(jnp.exp(logits - m), axis=-1, keepdims=True))
    lane_ids = lax.broadcasted_iota(jnp.int32, (N, V), 1)
    gold = jnp.sum(jnp.where(lane_ids == tgt_col, logits, 0.0),
                   axis=-1, keepdims=True)
    loss_ref[0, 0] = jnp.sum(lse - gold) * (1.0 / N)


def bigram_forward(inputs, targets, table):
    """inputs, targets: (B, T) int token ids; table: (V, V) f32.

    Returns (logits of shape (B*T, V), scalar loss) — matching the PyTorch
    forward path when targets is provided.
    """
    B, T = inputs.shape
    V = table.shape[0]
    N = B * T
    idx = inputs.reshape(N).astype(jnp.int32)
    tgt = targets.reshape(N).astype(jnp.int32)

    grid_spec = pltpu.PrefetchScalarGridSpec(
        num_scalar_prefetch=2,          # idx, tgt -> SMEM
        grid=(1,),
        in_specs=[
            # Whole table resident in VMEM: one contiguous auto-pipelined DMA.
            pl.BlockSpec((V, V), lambda i, idx_ref, tgt_ref: (0, 0)),
        ],
        out_specs=(
            pl.BlockSpec((N, V), lambda i, idx_ref, tgt_ref: (0, 0)),
            pl.BlockSpec(memory_space=pltpu.MemorySpace.SMEM),
        ),
    )

    logits, loss = pl.pallas_call(
        bigram_kernel,
        grid_spec=grid_spec,
        out_shape=(
            jax.ShapeDtypeStruct((N, V), jnp.float32),
            jax.ShapeDtypeStruct((1, 1), jnp.float32),
        ),
        compiler_params=pltpu.CompilerParams(
            dimension_semantics=("arbitrary",),
            # Explicit scoped-VMEM limit: raises the 16 MiB v5e default, stays
            # within v7x's 64 MiB physical VMEM. Total live VMEM here is tiny.
            vmem_limit_bytes=32 * 1024 * 1024,
        ),
    )(idx, tgt, table)
    return logits, loss[0, 0]


def bigram_forward_ref(inputs, targets, table):
    """Pure-JAX reference for validation."""
    B, T = inputs.shape
    V = table.shape[0]
    logits = table[inputs].reshape(B * T, V)
    tgt = targets.reshape(B * T)
    lse = jax.nn.logsumexp(logits, axis=-1)
    gold = jnp.take_along_axis(logits, tgt[:, None], axis=-1)[:, 0]
    return logits, jnp.mean(lse - gold)


# TODO(synk): generate() (autoregressive sampling with torch.multinomial) is a
# host-side loop over forward calls and is not implemented as a kernel.

if __name__ == "__main__":
    vocab_size = 128  # lane-aligned vocab
    B, T = 2, 8

    key = jax.random.PRNGKey(0)
    k_table, k_in, k_tgt = jax.random.split(key, 3)

    # nn.Embedding default init: N(0, 1)
    table = jax.random.normal(k_table, (vocab_size, vocab_size), dtype=jnp.float32)
    inputs = jax.random.randint(k_in, (B, T), 0, vocab_size, dtype=jnp.int32)
    targets = jax.random.randint(k_tgt, (B, T), 0, vocab_size, dtype=jnp.int32)

    logits, loss = bigram_forward(inputs, targets, table)
    jax.block_until_ready((logits, loss))

    logits_ref, loss_ref = bigram_forward_ref(inputs, targets, table)
    assert jnp.allclose(logits, logits_ref, atol=1e-5), "logits mismatch"
    assert jnp.allclose(loss, loss_ref, atol=1e-5), "loss mismatch"

    print("KERNEL_OK")
</pallas_src>

<mosaic_0001>
module attributes {stable_mosaic.version = 11 : i64} {
  func.func @bigram_kernel(%arg0: i32, %arg1: memref<16xi32, #tpu.memory_space<smem>>, %arg2: memref<16xi32, #tpu.memory_space<smem>>, %arg3: memref<128x128xf32, #tpu.memory_space<vmem>>, %arg4: memref<16x128xf32, #tpu.memory_space<vmem>>, %arg5: memref<1x1xf32, #tpu.memory_space<smem>>) attributes {dimension_semantics = [#tpu.dimension_semantics<arbitrary>], iteration_bounds = array<i64: 1>, scalar_prefetch = 2 : i64, scratch_operands = 0 : i64, tpu.core_type = #tpu.core_type<tc>, window_params = [{pipeline_mode = #tpu.pipeline_mode<synchronous>, transform_indices = @transform_0, window_bounds = array<i64: 128, 128>}, {pipeline_mode = #tpu.pipeline_mode<synchronous>, transform_indices = @transform_1, window_bounds = array<i64: 16, 128>}, {transform_indices = @transform_2, window_bounds = array<i64: 1, 1>}]} {
    %c0 = arith.constant 0 : index
    %0 = memref.load %arg1[%c0] : memref<16xi32, #tpu.memory_space<smem>>
    %1 = arith.index_cast %0 : i32 to index
    %c0_0 = arith.constant 0 : index
    %2 = vector.load %arg3[%1, %c0_0] : memref<128x128xf32, #tpu.memory_space<vmem>>, vector<1x128xf32>
    %c0_1 = arith.constant 0 : index
    %c0_2 = arith.constant 0 : index
    %3 = vector.load %arg4[%c0_1, %c0_2] : memref<16x128xf32, #tpu.memory_space<vmem>>, vector<1x128xf32>
    tpu.vector_store %arg4[%c0_1, %c0_2], %2 {strides = array<i32>} : memref<16x128xf32, #tpu.memory_space<vmem>>, vector<1x128xf32>,
    %c1 = arith.constant 1 : index
    %4 = memref.load %arg1[%c1] : memref<16xi32, #tpu.memory_space<smem>>
    %5 = arith.index_cast %4 : i32 to index
    %c0_3 = arith.constant 0 : index
    %6 = vector.load %arg3[%5, %c0_3] : memref<128x128xf32, #tpu.memory_space<vmem>>, vector<1x128xf32>
    %c1_4 = arith.constant 1 : index
    %c0_5 = arith.constant 0 : index
    %7 = vector.load %arg4[%c1_4, %c0_5] : memref<16x128xf32, #tpu.memory_space<vmem>>, vector<1x128xf32>
    tpu.vector_store %arg4[%c1_4, %c0_5], %6 {strides = array<i32>} : memref<16x128xf32, #tpu.memory_space<vmem>>, vector<1x128xf32>,
    %c2 = arith.constant 2 : index
    %8 = memref.load %arg1[%c2] : memref<16xi32, #tpu.memory_space<smem>>
    %9 = arith.index_cast %8 : i32 to index
    %c0_6 = arith.constant 0 : index
    %10 = vector.load %arg3[%9, %c0_6] : memref<128x128xf32, #tpu.memory_space<vmem>>, vector<1x128xf32>
    %c2_7 = arith.constant 2 : index
    %c0_8 = arith.constant 0 : index
    %11 = vector.load %arg4[%c2_7, %c0_8] : memref<16x128xf32, #tpu.memory_space<vmem>>, vector<1x128xf32>
    tpu.vector_store %arg4[%c2_7, %c0_8], %10 {strides = array<i32>} : memref<16x128xf32, #tpu.memory_space<vmem>>, vector<1x128xf32>,
    %c3 = arith.constant 3 : index
    %12 = memref.load %arg1[%c3] : memref<16xi32, #tpu.memory_space<smem>>
    %13 = arith.index_cast %12 : i32 to index
    %c0_9 = arith.constant 0 : index
    %14 = vector.load %arg3[%13, %c0_9] : memref<128x128xf32, #tpu.memory_space<vmem>>, vector<1x128xf32>
    %c3_10 = arith.constant 3 : index
    %c0_11 = arith.constant 0 : index
    %15 = vector.load %arg4[%c3_10, %c0_11] : memref<16x128xf32, #tpu.memory_space<vmem>>, vector<1x128xf32>
    tpu.vector_store %arg4[%c3_10, %c0_11], %14 {strides = array<i32>} : memref<16x128xf32, #tpu.memory_space<vmem>>, vector<1x128xf32>,
    %c4 = arith.constant 4 : index
    %16 = memref.load %arg1[%c4] : memref<16xi32, #tpu.memory_space<smem>>
    %17 = arith.index_cast %16 : i32 to index
    %c0_12 = arith.constant 0 : index
    %18 = vector.load %arg3[%17, %c0_12] : memref<128x128xf32, #tpu.memory_space<vmem>>, vector<1x128xf32>
    %c4_13 = arith.constant 4 : index
    %c0_14 = arith.constant 0 : index
    %19 = vector.load %arg4[%c4_13, %c0_14] : memref<16x128xf32, #tpu.memory_space<vmem>>, vector<1x128xf32>
    tpu.vector_store %arg4[%c4_13, %c0_14], %18 {strides = array<i32>} : memref<16x128xf32, #tpu.memory_space<vmem>>, vector<1x128xf32>,
    %c5 = arith.constant 5 : index
    %20 = memref.load %arg1[%c5] : memref<16xi32, #tpu.memory_space<smem>>
    %21 = arith.index_cast %20 : i32 to index
    %c0_15 = arith.constant 0 : index
    %22 = vector.load %arg3[%21, %c0_15] : memref<128x128xf32, #tpu.memory_space<vmem>>, vector<1x128xf32>
    %c5_16 = arith.constant 5 : index
    %c0_17 = arith.constant 0 : index
    %23 = vector.load %arg4[%c5_16, %c0_17] : memref<16x128xf32, #tpu.memory_space<vmem>>, vector<1x128xf32>
    tpu.vector_store %arg4[%c5_16, %c0_17], %22 {strides = array<i32>} : memref<16x128xf32, #tpu.memory_space<vmem>>, vector<1x128xf32>,
    %c6 = arith.constant 6 : index
    %24 = memref.load %arg1[%c6] : memref<16xi32, #tpu.memory_space<smem>>
    %25 = arith.index_cast %24 : i32 to index
    %c0_18 = arith.constant 0 : index
    %26 = vector.load %arg3[%25, %c0_18] : memref<128x128xf32, #tpu.memory_space<vmem>>, vector<1x128xf32>
    %c6_19 = arith.constant 6 : index
    %c0_20 = arith.constant 0 : index
    %27 = vector.load %arg4[%c6_19, %c0_20] : memref<16x128xf32, #tpu.memory_space<vmem>>, vector<1x128xf32>
    tpu.vector_store %arg4[%c6_19, %c0_20], %26 {strides = array<i32>} : memref<16x128xf32, #tpu.memory_space<vmem>>, vector<1x128xf32>,
    %c7 = arith.constant 7 : index
    %28 = memref.load %arg1[%c7] : memref<16xi32, #tpu.memory_space<smem>>
    %29 = arith.index_cast %28 : i32 to index
    %c0_21 = arith.constant 0 : index
    %30 = vector.load %arg3[%29, %c0_21] : memref<128x128xf32, #tpu.memory_space<vmem>>, vector<1x128xf32>
    %c7_22 = arith.constant 7 : index
    %c0_23 = arith.constant 0 : index
    %31 = vector.load %arg4[%c7_22, %c0_23] : memref<16x128xf32, #tpu.memory_space<vmem>>, vector<1x128xf32>
    tpu.vector_store %arg4[%c7_22, %c0_23], %30 {strides = array<i32>} : memref<16x128xf32, #tpu.memory_space<vmem>>, vector<1x128xf32>,
    %c8 = arith.constant 8 : index
    %32 = memref.load %arg1[%c8] : memref<16xi32, #tpu.memory_space<smem>>
    %33 = arith.index_cast %32 : i32 to index
    %c0_24 = arith.constant 0 : index
    %34 = vector.load %arg3[%33, %c0_24] : memref<128x128xf32, #tpu.memory_space<vmem>>, vector<1x128xf32>
    %c8_25 = arith.constant 8 : index
    %c0_26 = arith.constant 0 : index
    %35 = vector.load %arg4[%c8_25, %c0_26] : memref<16x128xf32, #tpu.memory_space<vmem>>, vector<1x128xf32>
    tpu.vector_store %arg4[%c8_25, %c0_26], %34 {strides = array<i32>} : memref<16x128xf32, #tpu.memory_space<vmem>>, vector<1x128xf32>,
    %c9 = arith.constant 9 : index
    %36 = memref.load %arg1[%c9] : memref<16xi32, #tpu.memory_space<smem>>
    %37 = arith.index_cast %36 : i32 to index
    %c0_27 = arith.constant 0 : index
    %38 = vector.load %arg3[%37, %c0_27] : memref<128x128xf32, #tpu.memory_space<vmem>>, vector<1x128xf32>
    %c9_28 = arith.constant 9 : index
    %c0_29 = arith.constant 0 : index
    %39 = vector.load %arg4[%c9_28, %c0_29] : memref<16x128xf32, #tpu.memory_space<vmem>>, vector<1x128xf32>
    tpu.vector_store %arg4[%c9_28, %c0_29], %38 {strides = array<i32>} : memref<16x128xf32, #tpu.memory_space<vmem>>, vector<1x128xf32>,
    %c10 = arith.constant 10 : index
    %40 = memref.load %arg1[%c10] : memref<16xi32, #tpu.memory_space<smem>>
    %41 = arith.index_cast %40 : i32 to index
    %c0_30 = arith.constant 0 : index
    %42 = vector.load %arg3[%41, %c0_30] : memref<128x128xf32, #tpu.memory_space<vmem>>, vector<1x128xf32>
    %c10_31 = arith.constant 10 : index
    %c0_32 = arith.constant 0 : index
    %43 = vector.load %arg4[%c10_31, %c0_32] : memref<16x128xf32, #tpu.memory_space<vmem>>, vector<1x128xf32>
    tpu.vector_store %arg4[%c10_31, %c0_32], %42 {strides = array<i32>} : memref<16x128xf32, #tpu.memory_space<vmem>>, vector<1x128xf32>,
    %c11 = arith.constant 11 : index
    %44 = memref.load %arg1[%c11] : memref<16xi32, #tpu.memory_space<smem>>
    %45 = arith.index_cast %44 : i32 to index
    %c0_33 = arith.constant 0 : index
    %46 = vector.load %arg3[%45, %c0_33] : memref<128x128xf32, #tpu.memory_space<vmem>>, vector<1x128xf32>
    %c11_34 = arith.constant 11 : index
    %c0_35 = arith.constant 0 : index
    %47 = vector.load %arg4[%c11_34, %c0_35] : memref<16x128xf32, #tpu.memory_space<vmem>>, vector<1x128xf32>
    tpu.vector_store %arg4[%c11_34, %c0_35], %46 {strides = array<i32>} : memref<16x128xf32, #tpu.memory_space<vmem>>, vector<1x128xf32>,
    %c12 = arith.constant 12 : index
    %48 = memref.load %arg1[%c12] : memref<16xi32, #tpu.memory_space<smem>>
    %49 = arith.index_cast %48 : i32 to index
    %c0_36 = arith.constant 0 : index
    %50 = vector.load %arg3[%49, %c0_36] : memref<128x128xf32, #tpu.memory_space<vmem>>, vector<1x128xf32>
    %c12_37 = arith.constant 12 : index
    %c0_38 = arith.constant 0 : index
    %51 = vector.load %arg4[%c12_37, %c0_38] : memref<16x128xf32, #tpu.memory_space<vmem>>, vector<1x128xf32>
    tpu.vector_store %arg4[%c12_37, %c0_38], %50 {strides = array<i32>} : memref<16x128xf32, #tpu.memory_space<vmem>>, vector<1x128xf32>,
    %c13 = arith.constant 13 : index
    %52 = memref.load %arg1[%c13] : memref<16xi32, #tpu.memory_space<smem>>
    %53 = arith.index_cast %52 : i32 to index
    %c0_39 = arith.constant 0 : index
    %54 = vector.load %arg3[%53, %c0_39] : memref<128x128xf32, #tpu.memory_space<vmem>>, vector<1x128xf32>
    %c13_40 = arith.constant 13 : index
    %c0_41 = arith.constant 0 : index
    %55 = vector.load %arg4[%c13_40, %c0_41] : memref<16x128xf32, #tpu.memory_space<vmem>>, vector<1x128xf32>
    tpu.vector_store %arg4[%c13_40, %c0_41], %54 {strides = array<i32>} : memref<16x128xf32, #tpu.memory_space<vmem>>, vector<1x128xf32>,
    %c14 = arith.constant 14 : index
    %56 = memref.load %arg1[%c14] : memref<16xi32, #tpu.memory_space<smem>>
    %57 = arith.index_cast %56 : i32 to index
    %c0_42 = arith.constant 0 : index
    %58 = vector.load %arg3[%57, %c0_42] : memref<128x128xf32, #tpu.memory_space<vmem>>, vector<1x128xf32>
    %c14_43 = arith.constant 14 : index
    %c0_44 = arith.constant 0 : index
    %59 = vector.load %arg4[%c14_43, %c0_44] : memref<16x128xf32, #tpu.memory_space<vmem>>, vector<1x128xf32>
    tpu.vector_store %arg4[%c14_43, %c0_44], %58 {strides = array<i32>} : memref<16x128xf32, #tpu.memory_space<vmem>>, vector<1x128xf32>,
    %c15 = arith.constant 15 : index
    %60 = memref.load %arg1[%c15] : memref<16xi32, #tpu.memory_space<smem>>
    %61 = arith.index_cast %60 : i32 to index
    %c0_45 = arith.constant 0 : index
    %62 = vector.load %arg3[%61, %c0_45] : memref<128x128xf32, #tpu.memory_space<vmem>>, vector<1x128xf32>
    %c15_46 = arith.constant 15 : index
    %c0_47 = arith.constant 0 : index
    %63 = vector.load %arg4[%c15_46, %c0_47] : memref<16x128xf32, #tpu.memory_space<vmem>>, vector<1x128xf32>
    tpu.vector_store %arg4[%c15_46, %c0_47], %62 {strides = array<i32>} : memref<16x128xf32, #tpu.memory_space<vmem>>, vector<1x128xf32>,
    %c0_48 = arith.constant 0 : index
    %c0_49 = arith.constant 0 : index
    %64 = vector.load %arg4[%c0_48, %c0_49] : memref<16x128xf32, #tpu.memory_space<vmem>>, vector<16x128xf32>
    %65 = tpu.iota {dimensions = array<i32: 0>} : vector<16x1xi32>
    %c0_i32 = arith.constant 0 : i32
    %66 = vector.broadcast %c0_i32 : i32 to vector<16x1xi32>
    %67 = arith.cmpi eq, %65, %66 : vector<16x1xi32>
    %c0_50 = arith.constant 0 : index
    %68 = memref.load %arg2[%c0_50] : memref<16xi32, #tpu.memory_space<smem>>
    %c0_i32_51 = arith.constant 0 : i32
    %69 = vector.broadcast %68 : i32 to vector<16x1xi32>
    %70 = vector.broadcast %c0_i32_51 : i32 to vector<16x1xi32>
    %71 = arith.select %67, %69, %70 : vector<16x1xi1>, vector<16x1xi32>
    %c1_i32 = arith.constant 1 : i32
    %72 = vector.broadcast %c1_i32 : i32 to vector<16x1xi32>
    %73 = arith.cmpi eq, %65, %72 : vector<16x1xi32>
    %c1_52 = arith.constant 1 : index
    %74 = memref.load %arg2[%c1_52] : memref<16xi32, #tpu.memory_space<smem>>
    %c0_i32_53 = arith.constant 0 : i32
    %75 = vector.broadcast %74 : i32 to vector<16x1xi32>
    %76 = vector.broadcast %c0_i32_53 : i32 to vector<16x1xi32>
    %77 = arith.select %73, %75, %76 : vector<16x1xi1>, vector<16x1xi32>
    %c2_i32 = arith.constant 2 : i32
    %78 = vector.broadcast %c2_i32 : i32 to vector<16x1xi32>
    %79 = arith.cmpi eq, %65, %78 : vector<16x1xi32>
    %c2_54 = arith.constant 2 : index
    %80 = memref.load %arg2[%c2_54] : memref<16xi32, #tpu.memory_space<smem>>
    %c0_i32_55 = arith.constant 0 : i32
    %81 = vector.broadcast %80 : i32 to vector<16x1xi32>
    %82 = vector.broadcast %c0_i32_55 : i32 to vector<16x1xi32>
    %83 = arith.select %79, %81, %82 : vector<16x1xi1>, vector<16x1xi32>
    %c3_i32 = arith.constant 3 : i32
    %84 = vector.broadcast %c3_i32 : i32 to vector<16x1xi32>
    %85 = arith.cmpi eq, %65, %84 : vector<16x1xi32>
    %c3_56 = arith.constant 3 : index
    %86 = memref.load %arg2[%c3_56] : memref<16xi32, #tpu.memory_space<smem>>
    %c0_i32_57 = arith.constant 0 : i32
    %87 = vector.broadcast %86 : i32 to vector<16x1xi32>
    %88 = vector.broadcast %c0_i32_57 : i32 to vector<16x1xi32>
    %89 = arith.select %85, %87, %88 : vector<16x1xi1>, vector<16x1xi32>
    %c4_i32 = arith.constant 4 : i32
    %90 = vector.broadcast %c4_i32 : i32 to vector<16x1xi32>
    %91 = arith.cmpi eq, %65, %90 : vector<16x1xi32>
    %c4_58 = arith.constant 4 : index
    %92 = memref.load %arg2[%c4_58] : memref<16xi32, #tpu.memory_space<smem>>
    %c0_i32_59 = arith.constant 0 : i32
    %93 = vector.broadcast %92 : i32 to vector<16x1xi32>
    %94 = vector.broadcast %c0_i32_59 : i32 to vector<16x1xi32>
    %95 = arith.select %91, %93, %94 : vector<16x1xi1>, vector<16x1xi32>
    %c5_i32 = arith.constant 5 : i32
    %96 = vector.broadcast %c5_i32 : i32 to vector<16x1xi32>
    %97 = arith.cmpi eq, %65, %96 : vector<16x1xi32>
    %c5_60 = arith.constant 5 : index
    %98 = memref.load %arg2[%c5_60] : memref<16xi32, #tpu.memory_space<smem>>
    %c0_i32_61 = arith.constant 0 : i32
    %99 = vector.broadcast %98 : i32 to vector<16x1xi32>
    %100 = vector.broadcast %c0_i32_61 : i32 to vector<16x1xi32>
    %101 = arith.select %97, %99, %100 : vector<16x1xi1>, vector<16x1xi32>
    %c6_i32 = arith.constant 6 : i32
    %102 = vector.broadcast %c6_i32 : i32 to vector<16x1xi32>
    %103 = arith.cmpi eq, %65, %102 : vector<16x1xi32>
    %c6_62 = arith.constant 6 : index
    %104 = memref.load %arg2[%c6_62] : memref<16xi32, #tpu.memory_space<smem>>
    %c0_i32_63 = arith.constant 0 : i32
    %105 = vector.broadcast %104 : i32 to vector<16x1xi32>
    %106 = vector.broadcast %c0_i32_63 : i32 to vector<16x1xi32>
    %107 = arith.select %103, %105, %106 : vector<16x1xi1>, vector<16x1xi32>
    %c7_i32 = arith.constant 7 : i32
    %108 = vector.broadcast %c7_i32 : i32 to vector<16x1xi32>
    %109 = arith.cmpi eq, %65, %108 : vector<16x1xi32>
    %c7_64 = arith.constant 7 : index
    %110 = memref.load %arg2[%c7_64] : memref<16xi32, #tpu.memory_space<smem>>
    %c0_i32_65 = arith.constant 0 : i32
    %111 = vector.broadcast %110 : i32 to vector<16x1xi32>
    %112 = vector.broadcast %c0_i32_65 : i32 to vector<16x1xi32>
    %113 = arith.select %109, %111, %112 : vector<16x1xi1>, vector<16x1xi32>
    %c8_i32 = arith.constant 8 : i32
    %114 = vector.broadcast %c8_i32 : i32 to vector<16x1xi32>
    %115 = arith.cmpi eq, %65, %114 : vector<16x1xi32>
    %c8_66 = arith.constant 8 : index
    %116 = memref.load %arg2[%c8_66] : memref<16xi32, #tpu.memory_space<smem>>
    %c0_i32_67 = arith.constant 0 : i32
    %117 = vector.broadcast %116 : i32 to vector<16x1xi32>
    %118 = vector.broadcast %c0_i32_67 : i32 to vector<16x1xi32>
    %119 = arith.select %115, %117, %118 : vector<16x1xi1>, vector<16x1xi32>
    %c9_i32 = arith.constant 9 : i32
    %120 = vector.broadcast %c9_i32 : i32 to vector<16x1xi32>
    %121 = arith.cmpi eq, %65, %120 : vector<16x1xi32>
    %c9_68 = arith.constant 9 : index
    %122 = memref.load %arg2[%c9_68] : memref<16xi32, #tpu.memory_space<smem>>
    %c0_i32_69 = arith.constant 0 : i32
    %123 = vector.broadcast %122 : i32 to vector<16x1xi32>
    %124 = vector.broadcast %c0_i32_69 : i32 to vector<16x1xi32>
    %125 = arith.select %121, %123, %124 : vector<16x1xi1>, vector<16x1xi32>
    %c10_i32 = arith.constant 10 : i32
    %126 = vector.broadcast %c10_i32 : i32 to vector<16x1xi32>
    %127 = arith.cmpi eq, %65, %126 : vector<16x1xi32>
    %c10_70 = arith.constant 10 : index
    %128 = memref.load %arg2[%c10_70] : memref<16xi32, #tpu.memory_space<smem>>
    %c0_i32_71 = arith.constant 0 : i32
    %129 = vector.broadcast %128 : i32 to vector<16x1xi32>
    %130 = vector.broadcast %c0_i32_71 : i32 to vector<16x1xi32>
    %131 = arith.select %127, %129, %130 : vector<16x1xi1>, vector<16x1xi32>
    %c11_i32 = arith.constant 11 : i32
    %132 = vector.broadcast %c11_i32 : i32 to vector<16x1xi32>
    %133 = arith.cmpi eq, %65, %132 : vector<16x1xi32>
    %c11_72 = arith.constant 11 : index
    %134 = memref.load %arg2[%c11_72] : memref<16xi32, #tpu.memory_space<smem>>
    %c0_i32_73 = arith.constant 0 : i32
    %135 = vector.broadcast %134 : i32 to vector<16x1xi32>
    %136 = vector.broadcast %c0_i32_73 : i32 to vector<16x1xi32>
    %137 = arith.select %133, %135, %136 : vector<16x1xi1>, vector<16x1xi32>
    %c12_i32 = arith.constant 12 : i32
    %138 = vector.broadcast %c12_i32 : i32 to vector<16x1xi32>
    %139 = arith.cmpi eq, %65, %138 : vector<16x1xi32>
    %c12_74 = arith.constant 12 : index
    %140 = memref.load %arg2[%c12_74] : memref<16xi32, #tpu.memory_space<smem>>
    %c0_i32_75 = arith.constant 0 : i32
    %141 = vector.broadcast %140 : i32 to vector<16x1xi32>
    %142 = vector.broadcast %c0_i32_75 : i32 to vector<16x1xi32>
    %143 = arith.select %139, %141, %142 : vector<16x1xi1>, vector<16x1xi32>
    %c13_i32 = arith.constant 13 : i32
    %144 = vector.broadcast %c13_i32 : i32 to vector<16x1xi32>
    %145 = arith.cmpi eq, %65, %144 : vector<16x1xi32>
    %c13_76 = arith.constant 13 : index
    %146 = memref.load %arg2[%c13_76] : memref<16xi32, #tpu.memory_space<smem>>
    %c0_i32_77 = arith.constant 0 : i32
    %147 = vector.broadcast %146 : i32 to vector<16x1xi32>
    %148 = vector.broadcast %c0_i32_77 : i32 to vector<16x1xi32>
    %149 = arith.select %145, %147, %148 : vector<16x1xi1>, vector<16x1xi32>
    %c14_i32 = arith.constant 14 : i32
    %150 = vector.broadcast %c14_i32 : i32 to vector<16x1xi32>
    %151 = arith.cmpi eq, %65, %150 : vector<16x1xi32>
    %c14_78 = arith.constant 14 : index
    %152 = memref.load %arg2[%c14_78] : memref<16xi32, #tpu.memory_space<smem>>
    %c0_i32_79 = arith.constant 0 : i32
    %153 = vector.broadcast %152 : i32 to vector<16x1xi32>
    %154 = vector.broadcast %c0_i32_79 : i32 to vector<16x1xi32>
    %155 = arith.select %151, %153, %154 : vector<16x1xi1>, vector<16x1xi32>
    %c15_i32 = arith.constant 15 : i32
    %156 = vector.broadcast %c15_i32 : i32 to vector<16x1xi32>
    %157 = arith.cmpi eq, %65, %156 : vector<16x1xi32>
    %c15_80 = arith.constant 15 : index
    %158 = memref.load %arg2[%c15_80] : memref<16xi32, #tpu.memory_space<smem>>
    %c0_i32_81 = arith.constant 0 : i32
    %159 = vector.broadcast %158 : i32 to vector<16x1xi32>
    %160 = vector.broadcast %c0_i32_81 : i32 to vector<16x1xi32>
    %161 = arith.select %157, %159, %160 : vector<16x1xi1>, vector<16x1xi32>
    %162 = arith.addi %71, %77 : vector<16x1xi32>
    %163 = arith.addi %83, %89 : vector<16x1xi32>
    %164 = arith.addi %95, %101 : vector<16x1xi32>
    %165 = arith.addi %107, %113 : vector<16x1xi32>
    %166 = arith.addi %119, %125 : vector<16x1xi32>
    %167 = arith.addi %131, %137 : vector<16x1xi32>
    %168 = arith.addi %143, %149 : vector<16x1xi32>
    %169 = arith.addi %155, %161 : vector<16x1xi32>
    %170 = arith.addi %162, %163 : vector<16x1xi32>
    %171 = arith.addi %164, %165 : vector<16x1xi32>
    %172 = arith.addi %166, %167 : vector<16x1xi32>
    %173 = arith.addi %168, %169 : vector<16x1xi32>
    %174 = arith.addi %170, %171 : vector<16x1xi32>
    %175 = arith.addi %172, %173 : vector<16x1xi32>
    %176 = arith.addi %174, %175 : vector<16x1xi32>
    %cst = arith.constant dense<0xFF800000> : vector<16xf32>
    %177 = vector.multi_reduction <maximumf>, %64, %cst [1] : vector<16x128xf32> to vector<16xf32>
    %178 = vector.shape_cast %177 : vector<16xf32> to vector<16x1xf32>
    %179 = vector.broadcast %178 : vector<16x1xf32> to vector<16x128xf32>
    %180 = arith.subf %64, %179 : vector<16x128xf32>
    %181 = math.exp %180 : vector<16x128xf32>
    %cst_82 = arith.constant dense<0.000000e+00> : vector<16xf32>
    %182 = vector.multi_reduction <add>, %181, %cst_82 [1] : vector<16x128xf32> to vector<16xf32>
    %183 = vector.shape_cast %182 : vector<16xf32> to vector<16x1xf32>
    %184 = math.log %183 : vector<16x1xf32>
    %185 = arith.addf %178, %184 : vector<16x1xf32>
    %186 = tpu.iota {dimensions = array<i32: 1>} : vector<16x128xi32>
    %187 = vector.broadcast %176 : vector<16x1xi32> to vector<16x128xi32>
    %188 = arith.cmpi eq, %186, %187 : vector<16x128xi32>
    %cst_83 = arith.constant 0.000000e+00 : f32
    %189 = vector.broadcast %cst_83 : f32 to vector<16x128xf32>
    %190 = arith.select %188, %64, %189 : vector<16x128xi1>, vector<16x128xf32>
    %cst_84 = arith.constant dense<0.000000e+00> : vector<16xf32>
    %191 = vector.multi_reduction <add>, %190, %cst_84 [1] : vector<16x128xf32> to vector<16xf32>
    %192 = vector.shape_cast %191 : vector<16xf32> to vector<16x1xf32>
    %193 = arith.subf %185, %192 : vector<16x1xf32>
    %194 = vector.shape_cast %193 : vector<16x1xf32> to vector<1x16x1xf32>
    %cst_85 = arith.constant dense<0.000000e+00> : vector<1xf32>
    %195 = vector.multi_reduction <add>, %194, %cst_85 [1, 2] : vector<1x16x1xf32> to vector<1xf32>
    %196 = vector.shape_cast %195 : vector<1xf32> to vector<1x1x1xf32>
    %197 = vector.extract %196[0, 0, 0] : f32 from vector<1x1x1xf32>
    %cst_86 = arith.constant 6.250000e-02 : f32
    %198 = arith.mulf %197, %cst_86 : f32
    %c0_87 = arith.constant 0 : index
    %c0_88 = arith.constant 0 : index
    %199 = memref.load %arg5[%c0_87, %c0_88] : memref<1x1xf32, #tpu.memory_space<smem>>
    memref.store %198, %arg5[%c0_87, %c0_88] : memref<1x1xf32, #tpu.memory_space<smem>>
    return
  }
  func.func @transform_0(%arg0: i32, %arg1: memref<16xi32, #tpu.memory_space<smem>>, %arg2: memref<16xi32, #tpu.memory_space<smem>>) -> (i32, i32) {
    %c0_i32 = arith.constant 0 : i32
    %c0_i32_0 = arith.constant 0 : i32
    %c0_i32_1 = arith.constant 0 : i32
    return %c0_i32, %c0_i32_0 : i32, i32
  }
  func.func @transform_1(%arg0: i32, %arg1: memref<16xi32, #tpu.memory_space<smem>>, %arg2: memref<16xi32, #tpu.memory_space<smem>>) -> (i32, i32) {
    %c0_i32 = arith.constant 0 : i32
    %c0_i32_0 = arith.constant 0 : i32
    %c0_i32_1 = arith.constant 0 : i32
    return %c0_i32, %c0_i32_0 : i32, i32
  }
  func.func @transform_2(%arg0: i32, %arg1: memref<16xi32, #tpu.memory_space<smem>>, %arg2: memref<16xi32, #tpu.memory_space<smem>>) -> (i32, i32) {
    %c0_i32 = arith.constant 0 : i32
    %c0_i32_0 = arith.constant 0 : i32
    %c0_i32_1 = arith.constant 0 : i32
    return %c0_i32, %c0_i32_0 : i32, i32
  }
}

</mosaic_0001>

<llo_original>
// kernel: tpu_custom_call.1
$region0: #{tpu_custom_call.1}
  #allocation0 [shape = 'u32[]', space=smem, size = 0x4, offset = 0x4, fixed_abs, tag = 'smem constant byte address 0x4 - core index']
  #allocation1 [shape = 'u32[144,128]{1,0:T(1,128)}', space=vmem, size = 0x12000, scoped, tag = 'internal scratch']
  #allocation2 [shape = 's32[1]{0}', space=sflag, size = 0x4, scoped, tag = 'scoped memory for tpu_custom_call.1']
  #allocation3 [shape = 'u8[512]{0}', space=smem, size = 0x200, scoped, tag = 'prefetched SMEM operand 0']
  #allocation4 [shape = 'u8[512]{0}', space=smem, size = 0x200, scoped, tag = 'prefetched SMEM operand 1']
  %s0 = inlined_call_operand.hbm [shape: s32[16], index: 0, kind: input, shape index: {}]
  %s1 = inlined_call_operand.vmem [shape: s32[16], index: 1, kind: input, shape index: {}]
  %s2 = inlined_call_operand.hbm [shape: f32[128,128], index: 2, kind: input, shape index: {}]
  %s3 = inlined_call_operand.hbm [shape: f32[16,128], index: 3, kind: output, shape index: {0}]
  %s4 = inlined_call_operand.hbm [shape: f32[1,1], index: 4, kind: output, shape index: {1}]
  %5 = xla_tuple %s3, %s4
  %s6 = sld [smem:[#allocation0]]
  $region26: #{tpu_custom_call.1} parent=0
    _
  %s8 = ssub.s32 1, %s6
  %s9 = scalar_select 0, %s8, %s6
  %11 = dma.hbm_to_smem %s0, 16, [#allocation3], [#allocation2]
  %s12 = sshll.u32 %s1, 4
  %s13 = int_to_ptr.vmem [resolvable:$true] %s12
  %15 = dma.vmem_to_smem %s13, 16, [#allocation4], [#allocation2]
  %16 = dma.done [#allocation2], 32
  %17 = sfence
  $region1: #{tpu_custom_call.1} parent=0
    #allocation5 [shape = 'u8[65536]{0}', space=vmem, size = 0x10000, scoped, tag = 'input window, operand 2, single buffered']
    #allocation6 [shape = 's32[1]{0}', space=sflag, size = 0x4, scoped, tag = 'scoped memory for tpu_custom_call.1']
    #allocation7 [shape = 's32[1]{0}', space=sflag, size = 0x4, scoped, tag = 'scoped memory for tpu_custom_call.1']
    #allocation8 [shape = 's32[1]{0}', space=sflag, size = 0x4, scoped, tag = 'scoped memory for tpu_custom_call.1']
    #allocation9 [shape = 'u8[8192]{0}', space=vmem, size = 0x2000, scoped, tag = 'output window, operand 0, single buffered']
    #allocation10 [shape = 'u8[512]{0}', space=smem, size = 0x200, scoped, tag = 'output window, operand 1, single buffered']
    %18 = vsyncpa [#allocation6], 0
    %19 = vsyncpa [#allocation7], 0
    %20 = vsyncpa [#allocation8], 0
    // Predicated region
    $region2: #{tpu_custom_call.1} parent=1 // pred_check
      _
    $region3: #{tpu_custom_call.1} parent=1 // pred_check_branch
      %22 = sbr.rel (0) target = $region5
    $region4: #{tpu_custom_call.1} parent=1 // pred_region
      %s24 = ssub.s32 2048, 2048
      %25 = vsyncadd [#allocation6], %s24
      %s26 = sshll.u32 [#allocation5], 4
      %s27 = int_to_ptr.vmem [resolvable:$true] %s26
      %32 = dma.hbm_to_vmem [thread:$0]  %s2, 2048, %s27, [#allocation6], 128, 128, 8
    $region5: #{tpu_custom_call.1} parent=1 // pred_fallthru
      _
    // Predicated region
    $region6: #{tpu_custom_call.1} parent=1 // pred_check
      _
    $region7: #{tpu_custom_call.1} parent=1 // pred_check_branch
      %34 = sbr.rel (0) target = $region9
    $region8: #{tpu_custom_call.1} parent=1 // pred_region
      %35 = dma.done [#allocation6], 2048
    $region9: #{tpu_custom_call.1} parent=1 // pred_fallthru
      _
    %s36 = sld [smem:[#allocation3]]
    %s37 = scalar_lea.vmem [#allocation5], %s36
    %v38 = vld [vmem:[%s37] sm:$0x1]
    %39 = vst [vmem:[#allocation9] sm:$0x1] %v38
    %s40 = sld [smem:[#allocation3 + $0x1]]
    %s41 = scalar_lea.vmem [#allocation5], %s40
    %v42 = vld [vmem:[%s41] sm:$0x1]
    %43 = vst [vmem:[#allocation9 + $0x1] sm:$0x1] %v42
    %s44 = sld [smem:[#allocation3 + $0x2]]
    %s45 = scalar_lea.vmem [#allocation5], %s44
    %v46 = vld [vmem:[%s45] sm:$0x1]
    %47 = vst [vmem:[#allocation9 + $0x2] sm:$0x1] %v46
    %s48 = sld [smem:[#allocation3 + $0x3]]
    %s49 = scalar_lea.vmem [#allocation5], %s48
    %v50 = vld [vmem:[%s49] sm:$0x1]
    %51 = vst [vmem:[#allocation9 + $0x3] sm:$0x1] %v50
    %s52 = sld [smem:[#allocation3 + $0x4]]
    %s53 = scalar_lea.vmem [#allocation5], %s52
    %v54 = vld [vmem:[%s53] sm:$0x1]
    %55 = vst [vmem:[#allocation9 + $0x4] sm:$0x1] %v54
    %s56 = sld [smem:[#allocation3 + $0x5]]
    %s57 = scalar_lea.vmem [#allocation5], %s56
    %v58 = vld [vmem:[%s57] sm:$0x1]
    %59 = vst [vmem:[#allocation9 + $0x5] sm:$0x1] %v58
    %s60 = sld [smem:[#allocation3 + $0x6]]
    %s61 = scalar_lea.vmem [#allocation5], %s60
    %v62 = vld [vmem:[%s61] sm:$0x1]
    %63 = vst [vmem:[#allocation9 + $0x6] sm:$0x1] %v62
    %s64 = sld [smem:[#allocation3 + $0x7]]
    %s65 = scalar_lea.vmem [#allocation5], %s64
    %v66 = vld [vmem:[%s65] sm:$0x1]
    %67 = vst [vmem:[#allocation9 + $0x7] sm:$0x1] %v66
    %s68 = sld [smem:[#allocation3 + $0x8]]
    %s69 = scalar_lea.vmem [#allocation5], %s68
    %v70 = vld [vmem:[%s69] sm:$0x1]
    %71 = vst [vmem:[#allocation9 + $0x8] sm:$0x1] %v70
    %s72 = sld [smem:[#allocation3 + $0x9]]
    %s73 = scalar_lea.vmem [#allocation5], %s72
    %v74 = vld [vmem:[%s73] sm:$0x1]
    %75 = vst [vmem:[#allocation9 + $0x9] sm:$0x1] %v74
    %s76 = sld [smem:[#allocation3 + $0xa]]
    %s77 = scalar_lea.vmem [#allocation5], %s76
    %v78 = vld [vmem:[%s77] sm:$0x1]
    %79 = vst [vmem:[#allocation9 + $0xa] sm:$0x1] %v78
    %s80 = sld [smem:[#allocation3 + $0xb]]
    %s81 = scalar_lea.vmem [#allocation5], %s80
    %v82 = vld [vmem:[%s81] sm:$0x1]
    %83 = vst [vmem:[#allocation9 + $0xb] sm:$0x1] %v82
    %s84 = sld [smem:[#allocation3 + $0xc]]
    %s85 = scalar_lea.vmem [#allocation5], %s84
    %v86 = vld [vmem:[%s85] sm:$0x1]
    %87 = vst [vmem:[#allocation9 + $0xc] sm:$0x1] %v86
    %s88 = sld [smem:[#allocation3 + $0xd]]
    %s89 = scalar_lea.vmem [#allocation5], %s88
    %v90 = vld [vmem:[%s89] sm:$0x1]
    %91 = vst [vmem:[#allocation9 + $0xd] sm:$0x1] %v90
    %s92 = sld [smem:[#allocation3 + $0xe]]
    %s93 = scalar_lea.vmem [#allocation5], %s92
    %v94 = vld [vmem:[%s93] sm:$0x1]
    %95 = vst [vmem:[#allocation9 + $0xe] sm:$0x1] %v94
    %s96 = sld [smem:[#allocation3 + $0xf]]
    %s97 = scalar_lea.vmem [#allocation5], %s96
    %v98 = vld [vmem:[%s97] sm:$0x1]
    %99 = vst [vmem:[#allocation9 + $0xf] sm:$0x1] %v98
    %v100 = vld [vmem:[#allocation9] sm:$0xff]
    %v101 = vld [vmem:[#allocation9 + $0x8] sm:$0xff]
    %v102 = vlaneseq
    %v103 = vshrl.u32 %v102, 7
    %v104 = vadd.s32 %v103, 8
    %vm105 = vcmp.eq.s32.totalorder %v103, 0
    %vm106 = vcmp.eq.s32.totalorder %v104, 0
    %s107 = sld [smem:[#allocation4]]
    %v108 = vstv %s107
    %v109 = vsel %vm105, %v108, 0
    %v110 = vsel %vm106, %v108, 0
    %vm111 = vcmp.eq.s32.totalorder %v103, 1
    %vm112 = vcmp.eq.s32.totalorder %v104, 1
    %s113 = sld [smem:[#allocation4 + $0x1]]
    %v114 = vstv %s113
    %v115 = vsel %vm111, %v114, 0
    %v116 = vsel %vm112, %v114, 0
    %vm117 = vcmp.eq.s32.totalorder %v103, 2
    %vm118 = vcmp.eq.s32.totalorder %v104, 2
    %s119 = sld [smem:[#allocation4 + $0x2]]
    %v120 = vstv %s119
    %v121 = vsel %vm117, %v120, 0
    %v122 = vsel %vm118, %v120, 0
    %vm123 = vcmp.eq.s32.totalorder %v103, 3
    %vm124 = vcmp.eq.s32.totalorder %v104, 3
    %s125 = sld [smem:[#allocation4 + $0x3]]
    %v126 = vstv %s125
    %v127 = vsel %vm123, %v126, 0
    %v128 = vsel %vm124, %v126, 0
    %vm129 = vcmp.eq.s32.totalorder %v103, 4
    %vm130 = vcmp.eq.s32.totalorder %v104, 4
    %s131 = sld [smem:[#allocation4 + $0x4]]
    %v132 = vstv %s131
    %v133 = vsel %vm129, %v132, 0
    %v134 = vsel %vm130, %v132, 0
    %vm135 = vcmp.eq.s32.totalorder %v103, 5
    %vm136 = vcmp.eq.s32.totalorder %v104, 5
    %s137 = sld [smem:[#allocation4 + $0x5]]
    %v138 = vstv %s137
    %v139 = vsel %vm135, %v138, 0
    %v140 = vsel %vm136, %v138, 0
    %vm141 = vcmp.eq.s32.totalorder %v103, 6
    %vm142 = vcmp.eq.s32.totalorder %v104, 6
    %s143 = sld [smem:[#allocation4 + $0x6]]
    %v144 = vstv %s143
    %v145 = vsel %vm141, %v144, 0
    %v146 = vsel %vm142, %v144, 0
    %vm147 = vcmp.eq.s32.totalorder %v103, 7
    %vm148 = vcmp.eq.s32.totalorder %v104, 7
    %s149 = sld [smem:[#allocation4 + $0x7]]
    %v150 = vstv %s149
    %v151 = vsel %vm147, %v150, 0
    %v152 = vsel %vm148, %v150, 0
    %vm153 = vcmp.eq.s32.totalorder %v103, 8
    %vm154 = vcmp.eq.s32.totalorder %v104, 8
    %s155 = sld [smem:[#allocation4 + $0x8]]
    %v156 = vstv %s155
    %v157 = vsel %vm153, %v156, 0
    %v158 = vsel %vm154, %v156, 0
    %vm159 = vcmp.eq.s32.totalorder %v103, 9
    %vm160 = vcmp.eq.s32.totalorder %v104, 9
    %s161 = sld [smem:[#allocation4 + $0x9]]
    %v162 = vstv %s161
    %v163 = vsel %vm159, %v162, 0
    %v164 = vsel %vm160, %v162, 0
    %vm165 = vcmp.eq.s32.totalorder %v103, 10
    %vm166 = vcmp.eq.s32.totalorder %v104, 10
    %s167 = sld [smem:[#allocation4 + $0xa]]
    %v168 = vstv %s167
    %v169 = vsel %vm165, %v168, 0
    %v170 = vsel %vm166, %v168, 0
    %vm171 = vcmp.eq.s32.totalorder %v103, 11
    %vm172 = vcmp.eq.s32.totalorder %v104, 11
    %s173 = sld [smem:[#allocation4 + $0xb]]
    %v174 = vstv %s173
    %v175 = vsel %vm171, %v174, 0
    %v176 = vsel %vm172, %v174, 0
    %vm177 = vcmp.eq.s32.totalorder %v103, 12
    %vm178 = vcmp.eq.s32.totalorder %v104, 12
    %s179 = sld [smem:[#allocation4 + $0xc]]
    %v180 = vstv %s179
    %v181 = vsel %vm177, %v180, 0
    %v182 = vsel %vm178, %v180, 0
    %vm183 = vcmp.eq.s32.totalorder %v103, 13
    %vm184 = vcmp.eq.s32.totalorder %v104, 13
    %s185 = sld [smem:[#allocation4 + $0xd]]
    %v186 = vstv %s185
    %v187 = vsel %vm183, %v186, 0
    %v188 = vsel %vm184, %v186, 0
    %vm189 = vcmp.eq.s32.totalorder %v103, 14
    %vm190 = vcmp.eq.s32.totalorder %v104, 14
    %s191 = sld [smem:[#allocation4 + $0xe]]
    %v192 = vstv %s191
    %v193 = vsel %vm189, %v192, 0
    %v194 = vsel %vm190, %v192, 0
    %vm195 = vcmp.eq.s32.totalorder %v103, 15
    %vm196 = vcmp.eq.s32.totalorder %v104, 15
    %s197 = sld [smem:[#allocation4 + $0xf]]
    %v198 = vstv %s197
    %v199 = vsel %vm195, %v198, 0
    %v200 = vsel %vm196, %v198, 0
    %v201 = vadd.s32 %v109, %v115
    %v202 = vadd.s32 %v110, %v116
    %v203 = vadd.s32 %v121, %v127
    %v204 = vadd.s32 %v122, %v128
    %v205 = vadd.s32 %v133, %v139
    %v206 = vadd.s32 %v134, %v140
    %v207 = vadd.s32 %v145, %v151
    %v208 = vadd.s32 %v146, %v152
    %v209 = vadd.s32 %v157, %v163
    %v210 = vadd.s32 %v158, %v164
    %v211 = vadd.s32 %v169, %v175
    %v212 = vadd.s32 %v170, %v176
    %v213 = vadd.s32 %v181, %v187
    %v214 = vadd.s32 %v182, %v188
    %v215 = vadd.s32 %v193, %v199
    %v216 = vadd.s32 %v194, %v200
    %v217 = vadd.s32 %v201, %v203
    %v218 = vadd.s32 %v202, %v204
    %v219 = vadd.s32 %v205, %v207
    %v220 = vadd.s32 %v206, %v208
    %v221 = vadd.s32 %v209, %v211
    %v222 = vadd.s32 %v210, %v212
    %v223 = vadd.s32 %v213, %v215
    %v224 = vadd.s32 %v214, %v216
    %v225 = vadd.s32 %v217, %v219
    %v226 = vadd.s32 %v218, %v220
    %v227 = vadd.s32 %v221, %v223
    %v228 = vadd.s32 %v222, %v224
    %v229 = vadd.s32 %v225, %v227
    %v230 = vadd.s32 %v226, %v228
    %231 = vmax.xlane.f32.xlu0 %v100
    %v232 = vpop.xlane.xlu0 %231
    %233 = vmax.xlane.f32.xlu0 %v101
    %v234 = vpop.xlane.xlu0 %233
    %v235 = vsub.f32 %v100, %v232
    %v236 = vsub.f32 %v101, %v234
    %v237 = vmul.f32 %v235, 1.442695
    %v238 = vpow.pop %v237
    %v239 = vmul.f32 %v236, 1.442695
    %v240 = vpow.pop %v239
    %241 = vadd.xlane.f32.xlu0 %v238
    %v242 = vpop.xlane.xlu0 %241
    %243 = vadd.xlane.f32.xlu0 %v240
    %v244 = vpop.xlane.xlu0 %243
    %v245 = vlog2.pop %v242
    %v246 = vmul.f32 %v245, 0.6931472
    %v247 = vlog2.pop %v244
    %v248 = vmul.f32 %v247, 0.6931472
    %v249 = vadd.f32 %v232, %v246
    %v250 = vadd.f32 %v234, %v248
    %v251 = vlaneseq
    %v252 = vand.u32 %v251, 127
    %vm253 = vcmp.eq.s32.totalorder %v252, %v229
    %vm254 = vcmp.eq.s32.totalorder %v252, %v230
    %v255 = vsel %vm253, %v100, 0.0
    %v256 = vsel %vm254, %v101, 0.0
    %257 = vadd.xlane.f32.xlu0 %v255
    %v258 = vpop.xlane.xlu0 %257
    %259 = vadd.xlane.f32.xlu0 %v256
    %v260 = vpop.xlane.xlu0 %259
    %v261 = vsub.f32 %v249, %v258
    %v262 = vsub.f32 %v250, %v260
    %vm263 = vcmask 7168
    %v264 = vsel %vm263, %v261, 0.0
    %v265 = vsel %vm263, %v262, 0.0
    %v266 = vadd.f32 %v264, %v265
    %267 = vadd.xlane.f32.xlu0 %v266
    %v268 = vpop.xlane.xlu0 %267
    %v269 = vrot.slane %v268, 4
    %v270 = vadd.f32 %v268, %v269
    %v271 = vrot.slane %v270, 2
    %v272 = vadd.f32 %v270, %v271
    %v273 = vrot.slane %v272, 1
    %v274 = vadd.f32 %v272, %v273
    %s275 = vtos %v274
    %s276 = smul.f32 %s275, 0.0625
    %s277 = scalar_lea.smem [#allocation10], 0
    %278 = sst [smem:[%s277]] %s276
    // Predicated region
    $region10: #{tpu_custom_call.1} parent=1 // pred_check
      _
    $region11: #{tpu_custom_call.1} parent=1 // pred_check_branch
      %280 = sbr.rel (0) target = $region13
    $region12: #{tpu_custom_call.1} parent=1 // pred_region
      %s282 = ssub.s32 256, 256
      %283 = vsyncadd [#allocation7], %s282
      %s284 = sshll.u32 [#allocation9], 4
      %s285 = int_to_ptr.vmem [resolvable:$true] %s284
      %290 = dma.vmem_to_hbm [thread:$0]  %s285, 256, %s3, [#allocation7], 128, 128, 8
    $region13: #{tpu_custom_call.1} parent=1 // pred_fallthru
      _
    // Predicated region
    $region14: #{tpu_custom_call.1} parent=1 // pred_check
      _
    $region15: #{tpu_custom_call.1} parent=1 // pred_check_branch
      %292 = sbr.rel (0) target = $region17
    $region16: #{tpu_custom_call.1} parent=1 // pred_region
      %s294 = ssub.s32 16, 16
      %295 = vsyncadd [#allocation8], %s294
      %298 = dma.smem_to_hbm [#allocation10], 16, %s4, [#allocation8]
    $region17: #{tpu_custom_call.1} parent=1 // pred_fallthru
      _
    // Predicated region
    $region18: #{tpu_custom_call.1} parent=1 // pred_check
      _
    $region19: #{tpu_custom_call.1} parent=1 // pred_check_branch
      %300 = sbr.rel (0) target = $region21
    $region20: #{tpu_custom_call.1} parent=1 // pred_region
      %301 = dma.done [#allocation7], 256
    $region21: #{tpu_custom_call.1} parent=1 // pred_fallthru
      _
    // Predicated region
    $region22: #{tpu_custom_call.1} parent=1 // pred_check
      _
    $region23: #{tpu_custom_call.1} parent=1 // pred_check_branch
      %303 = sbr.rel (0) target = $region25
    $region24: #{tpu_custom_call.1} parent=1 // pred_region
      %304 = dma.done [#allocation8], 16
    $region25: #{tpu_custom_call.1} parent=1 // pred_fallthru
      _
    %305 = sfence
    %306 = vsyncpa [#allocation6], 1
    %307 = vsyncpa [#allocation7], 1
    %308 = vsyncpa [#allocation8], 1

</llo_original>
